<compile_context>
chip_gen: v5e
topology: v5e:2x2
jax: 0.10.0
libtpu: 0.0.40
codegen_flags: <defaults>
</compile_context>

<pallas_src>
import jax
import jax.numpy as jnp
from jax.experimental import pallas as pl
from jax.experimental.pallas import tpu as pltpu

HIDDEN = 128   # the module's hidden width (hidden_layers=[128]; both streams use 128)
LANES = 128    # TPU lane width


def _round_up(n, m):
    return ((n + m - 1) // m) * m


def duel_q_kernel(x_ref, w_sh_ref, b_sh_ref, w1_ref, b1_ref, w2_ref, b2_ref, q_ref):
    # shared_net: Linear(input_dim, 128) + ReLU. x is cast in-kernel (VPU pass
    # hidden under MXU/DMA) instead of a separate host-side astype over HBM.
    x = x_ref[...].astype(w_sh_ref.dtype)
    shared = jnp.dot(x, w_sh_ref[...], preferred_element_type=jnp.float32)
    shared = jnp.maximum(shared + b_sh_ref[...], 0.0)

    # fused stream-1: Linear(128, 256) + ReLU  (= value-Linear1 ++ advantage-Linear1)
    h = jnp.dot(shared.astype(w1_ref.dtype), w1_ref[...],
                preferred_element_type=jnp.float32)
    h = jnp.maximum(h + b1_ref[...], 0.0)

    # fused stream-2 (K=256, fills the 2x256x256 MXU on v6e/v7x):
    #   rows   0:128  = value weight broadcast across output lanes  (value term)
    #   rows 128:256  = mean-folded advantage weights               (adv - mean)
    # b2 already contains b_a2 @ C + b_v2; padded lanes are zero.
    q = jnp.dot(h.astype(w2_ref.dtype), w2_ref[...],
                preferred_element_type=jnp.float32)
    q_ref[...] = (q + b2_ref[...]).astype(q_ref.dtype)


def prepare_params(params, compute_dtype=jnp.bfloat16):
    """One-time host-side weight transform (concat + dueling/value fold + lane pad)."""
    f32 = jnp.float32
    output_dim = params["w_a2"].shape[1]
    n_pad = _round_up(output_dim, LANES)

    # stream-1 fusion
    w1 = jnp.concatenate([params["w_v1"], params["w_a1"]], axis=1).astype(f32)  # [128,256]
    b1 = jnp.concatenate([params["b_v1"], params["b_a1"]], axis=1).astype(f32)  # [1,256]

    # dueling-mean fold:  adv - mean(adv) == adv @ C  with C = I - 11^T/out
    center = (jnp.eye(output_dim, dtype=f32)
              - jnp.full((output_dim, output_dim), 1.0 / output_dim, f32))
    w_a2 = params["w_a2"].astype(f32) @ center                                   # [128,out]
    b2 = params["b_a2"].astype(f32) @ center + params["b_v2"].astype(f32)        # [1,out]

    # value-head fold: broadcast the [128,1] value weight across output lanes and
    # stack on top of the advantage weights -> single [256, out] matmul.
    w_v2 = jnp.tile(params["w_v2"].astype(f32), (1, output_dim))                  # [128,out]
    w2 = jnp.concatenate([w_v2, w_a2], axis=0)                                    # [256,out]

    # lane-dense output: pad N up to a multiple of 128 (padded lanes produce 0).
    w2 = jnp.pad(w2, ((0, 0), (0, n_pad - output_dim)))
    b2 = jnp.pad(b2, ((0, 0), (0, n_pad - output_dim)))

    return dict(
        w_sh=params["w_sh"].astype(compute_dtype),
        b_sh=params["b_sh"].astype(f32),
        w1=w1.astype(compute_dtype),
        b1=b1,
        w2=w2.astype(compute_dtype),
        b2=b2,
        output_dim=output_dim,
    )


def _vmem_estimate(tb, input_dim, n_pad, x_itemsize, weight_bytes):
    x_tile = tb * input_dim * x_itemsize          # streamed input tile
    q_tile = tb * n_pad * 4                       # streamed output tile (f32)
    act = tb * (HIDDEN + 2 * HIDDEN + n_pad) * 4  # shared + h + q working set
    return 2 * (x_tile + q_tile) + 2 * weight_bytes + act


def duel_q_forward(x, prepped, *, block_b=2048):
    """x: [B, input_dim]; prepped: output of prepare_params. Returns [B, output_dim] f32."""
    B, input_dim = x.shape
    output_dim = prepped["output_dim"]
    n_pad = prepped["w2"].shape[1]

    weights = (prepped["w_sh"], prepped["b_sh"], prepped["w1"], prepped["b1"],
               prepped["w2"], prepped["b2"])
    weight_bytes = sum(int(a.size) * a.dtype.itemsize for a in weights)

    # Batch tile: large enough to amortize the ~0.35 us per-grid-step overhead,
    # but keep >= 2 blocks whenever B allows it (v7x megacore sharding), and
    # shrink until the double-buffered working set fits a 24 MiB budget
    # (conservative for v7x's 32 MiB scoped / 64 MiB physical VMEM).
    TB = max(8, min(int(block_b), _round_up(pl.cdiv(B, 2), 8)))
    while TB > 8 and _vmem_estimate(TB, input_dim, n_pad, x.dtype.itemsize,
                                    weight_bytes) > (24 << 20):
        TB = max(8, _round_up(TB // 2, 8))
    num_blocks = pl.cdiv(B, TB)
    Bp = num_blocks * TB

    # Pad the batch only when it is ragged w.r.t. the tile (tail rows are
    # computed on zeros and dropped). No dtype pass over x: cast is in-kernel.
    xp = x if Bp == B else jnp.pad(x, ((0, Bp - B), (0, 0)))

    def resident(shape):
        # full-extent block, constant index map -> DMA'd once, VMEM-resident
        return pl.BlockSpec(shape, lambda i: (0, 0))

    in_specs = [
        pl.BlockSpec((TB, input_dim), lambda i: (i, 0)),   # x: batch-tiled, streamed
        resident(prepped["w_sh"].shape), resident(prepped["b_sh"].shape),
        resident(prepped["w1"].shape), resident(prepped["b1"].shape),
        resident(prepped["w2"].shape), resident(prepped["b2"].shape),
    ]
    out_specs = pl.BlockSpec((TB, n_pad), lambda i: (i, 0))  # lane-dense (128-mult) q

    vmem_est = _vmem_estimate(TB, input_dim, n_pad, xp.dtype.itemsize, weight_bytes)
    vmem_limit = int(min(max(vmem_est + (4 << 20), 16 << 20), 32 << 20))

    flops = 2 * Bp * (input_dim * HIDDEN + HIDDEN * 2 * HIDDEN + 2 * HIDDEN * n_pad)
    bytes_accessed = (int(xp.size) * xp.dtype.itemsize
                      + Bp * n_pad * 4 + weight_bytes)

    # TODO(synk): if the consumer tolerates bf16 Q-values (e.g. pure argmax),
    # switch out_shape to bfloat16 to halve the writeback bytes.
    q = pl.pallas_call(
        duel_q_kernel,
        out_shape=jax.ShapeDtypeStruct((Bp, n_pad), jnp.float32),
        grid=(num_blocks,),
        in_specs=in_specs,
        out_specs=out_specs,
        compiler_params=pltpu.CompilerParams(
            dimension_semantics=("parallel",),      # shard batch tiles across TCs (v7x)
            vmem_limit_bytes=vmem_limit),
        cost_estimate=pl.CostEstimate(
            flops=int(flops), transcendentals=0, bytes_accessed=int(bytes_accessed)),
    )(xp, *weights)
    return q[:B, :output_dim]


def init_params(key, input_dim, output_dim, hidden=HIDDEN):
    """Deterministic synthetic parameters. Weights are [in, out]; biases [1, out]."""
    ks = jax.random.split(key, 10)

    def lin(kw, kb, fan_in, fan_out):
        bound = 1.0 / jnp.sqrt(jnp.float32(fan_in))
        w = jax.random.uniform(kw, (fan_in, fan_out), jnp.float32, -bound, bound)
        b = jax.random.uniform(kb, (1, fan_out), jnp.float32, -bound, bound)
        return w, b

    w_sh, b_sh = lin(ks[0], ks[1], input_dim, hidden)   # shared_net Linear
    w_v1, b_v1 = lin(ks[2], ks[3], hidden, 128)         # value stream Linear 1
    w_v2, b_v2 = lin(ks[4], ks[5], 128, 1)              # value stream Linear 2
    w_a1, b_a1 = lin(ks[6], ks[7], hidden, 128)         # advantage stream Linear 1
    w_a2, b_a2 = lin(ks[8], ks[9], 128, output_dim)     # advantage stream Linear 2

    return dict(w_sh=w_sh, b_sh=b_sh,
                w_v1=w_v1, b_v1=b_v1, w_v2=w_v2, b_v2=b_v2,
                w_a1=w_a1, b_a1=b_a1, w_a2=w_a2, b_a2=b_a2)


def duel_q_ref(x, p):
    """Pure-JAX reference (mirrors the PyTorch forward exactly)."""
    shared = jnp.maximum(x @ p["w_sh"] + p["b_sh"], 0.0)
    value = jnp.maximum(shared @ p["w_v1"] + p["b_v1"], 0.0) @ p["w_v2"] + p["b_v2"]
    adv = jnp.maximum(shared @ p["w_a1"] + p["b_a1"], 0.0) @ p["w_a2"] + p["b_a2"]
    return value + (adv - adv.mean(axis=1, keepdims=True))


if __name__ == "__main__":
    key = jax.random.PRNGKey(0)
    k_x, k_p = jax.random.split(key)

    B, input_dim, output_dim = 2, 32, 8
    x = jax.random.normal(k_x, (B, input_dim), dtype=jnp.float32)
    params = init_params(k_p, input_dim, output_dim)

    q_ref = jax.block_until_ready(duel_q_ref(x, params))

    # fp32 compute path: the structural transforms (stream concat, dueling-mean
    # fold, value-head fold, lane padding, zero-padded tail rows) are exact.
    prep32 = prepare_params(params, compute_dtype=jnp.float32)
    q32 = jax.block_until_ready(duel_q_forward(x, prep32))
    assert q32.shape == (B, output_dim)
    assert jnp.allclose(q32, q_ref, atol=1e-3, rtol=1e-3), "fp32 mismatch vs reference"

    # default bf16 compute path (fp32 MXU accumulation) -> looser tolerance.
    prep16 = prepare_params(params)              # bfloat16 weights
    q16 = jax.block_until_ready(duel_q_forward(x, prep16))
    assert q16.shape == (B, output_dim)
    assert jnp.allclose(q16, q_ref, atol=5e-2, rtol=5e-2), "bf16 mismatch vs reference"

    print("KERNEL_OK")
</pallas_src>

<mosaic_0001>
module attributes {stable_mosaic.version = 11 : i64} {
  func.func @duel_q_kernel(%arg0: i32, %arg1: memref<8x32xf32, #tpu.memory_space<vmem>>, %arg2: memref<32x128xf32, #tpu.memory_space<vmem>>, %arg3: memref<1x128xf32, #tpu.memory_space<vmem>>, %arg4: memref<128x256xf32, #tpu.memory_space<vmem>>, %arg5: memref<1x256xf32, #tpu.memory_space<vmem>>, %arg6: memref<256x128xf32, #tpu.memory_space<vmem>>, %arg7: memref<1x128xf32, #tpu.memory_space<vmem>>, %arg8: memref<8x128xf32, #tpu.memory_space<vmem>>) attributes {dimension_semantics = [#tpu.dimension_semantics<parallel>], iteration_bounds = array<i64: 1>, scalar_prefetch = 0 : i64, scratch_operands = 0 : i64, tpu.core_type = #tpu.core_type<tc>, window_params = [{transform_indices = @transform_0, window_bounds = array<i64: 8, 32>}, {pipeline_mode = #tpu.pipeline_mode<synchronous>, transform_indices = @transform_1, window_bounds = array<i64: 32, 128>}, {pipeline_mode = #tpu.pipeline_mode<synchronous>, transform_indices = @transform_2, window_bounds = array<i64: 1, 128>}, {pipeline_mode = #tpu.pipeline_mode<synchronous>, transform_indices = @transform_3, window_bounds = array<i64: 128, 256>}, {pipeline_mode = #tpu.pipeline_mode<synchronous>, transform_indices = @transform_4, window_bounds = array<i64: 1, 256>}, {pipeline_mode = #tpu.pipeline_mode<synchronous>, transform_indices = @transform_5, window_bounds = array<i64: 256, 128>}, {pipeline_mode = #tpu.pipeline_mode<synchronous>, transform_indices = @transform_6, window_bounds = array<i64: 1, 128>}, {transform_indices = @transform_7, window_bounds = array<i64: 8, 128>}]} {
    %c0 = arith.constant 0 : index
    %c0_0 = arith.constant 0 : index
    %0 = vector.load %arg1[%c0, %c0_0] : memref<8x32xf32, #tpu.memory_space<vmem>>, vector<8x32xf32>
    %c0_1 = arith.constant 0 : index
    %c0_2 = arith.constant 0 : index
    %1 = vector.load %arg2[%c0_1, %c0_2] : memref<32x128xf32, #tpu.memory_space<vmem>>, vector<32x128xf32>
    %cst = arith.constant dense<0.000000e+00> : vector<8x128xf32>
    %2 = tpu.matmul %0, %1, %cst {dimension_numbers = #tpu.dot_dimension_numbers<[1], [0], [0], [1], [0, 0, 1, 1], [], []>} : vector<8x32xf32>, vector<32x128xf32>, vector<8x128xf32> -> vector<8x128xf32>
    %c0_3 = arith.constant 0 : index
    %c0_4 = arith.constant 0 : index
    %3 = vector.load %arg3[%c0_3, %c0_4] : memref<1x128xf32, #tpu.memory_space<vmem>>, vector<1x128xf32>
    %4 = vector.broadcast %3 : vector<1x128xf32> to vector<8x128xf32>
    %5 = arith.addf %2, %4 : vector<8x128xf32>
    %cst_5 = arith.constant 0.000000e+00 : f32
    %6 = vector.broadcast %cst_5 : f32 to vector<8x128xf32>
    %7 = arith.maximumf %5, %6 : vector<8x128xf32>
    %c0_6 = arith.constant 0 : index
    %c0_7 = arith.constant 0 : index
    %8 = vector.load %arg4[%c0_6, %c0_7] : memref<128x256xf32, #tpu.memory_space<vmem>>, vector<128x256xf32>
    %cst_8 = arith.constant dense<0.000000e+00> : vector<8x256xf32>
    %9 = tpu.matmul %7, %8, %cst_8 {dimension_numbers = #tpu.dot_dimension_numbers<[1], [0], [0], [1], [0, 0, 1, 1], [], []>} : vector<8x128xf32>, vector<128x256xf32>, vector<8x256xf32> -> vector<8x256xf32>
    %c0_9 = arith.constant 0 : index
    %c0_10 = arith.constant 0 : index
    %10 = vector.load %arg5[%c0_9, %c0_10] : memref<1x256xf32, #tpu.memory_space<vmem>>, vector<1x256xf32>
    %11 = vector.broadcast %10 : vector<1x256xf32> to vector<8x256xf32>
    %12 = arith.addf %9, %11 : vector<8x256xf32>
    %cst_11 = arith.constant 0.000000e+00 : f32
    %13 = vector.broadcast %cst_11 : f32 to vector<8x256xf32>
    %14 = arith.maximumf %12, %13 : vector<8x256xf32>
    %c0_12 = arith.constant 0 : index
    %c0_13 = arith.constant 0 : index
    %15 = vector.load %arg6[%c0_12, %c0_13] : memref<256x128xf32, #tpu.memory_space<vmem>>, vector<256x128xf32>
    %cst_14 = arith.constant dense<0.000000e+00> : vector<8x128xf32>
    %16 = tpu.matmul %14, %15, %cst_14 {dimension_numbers = #tpu.dot_dimension_numbers<[1], [0], [0], [1], [0, 0, 1, 1], [], []>} : vector<8x256xf32>, vector<256x128xf32>, vector<8x128xf32> -> vector<8x128xf32>
    %c0_15 = arith.constant 0 : index
    %c0_16 = arith.constant 0 : index
    %17 = vector.load %arg7[%c0_15, %c0_16] : memref<1x128xf32, #tpu.memory_space<vmem>>, vector<1x128xf32>
    %18 = vector.broadcast %17 : vector<1x128xf32> to vector<8x128xf32>
    %19 = arith.addf %16, %18 : vector<8x128xf32>
    %c0_17 = arith.constant 0 : index
    %c0_18 = arith.constant 0 : index
    %20 = vector.load %arg8[%c0_17, %c0_18] : memref<8x128xf32, #tpu.memory_space<vmem>>, vector<8x128xf32>
    tpu.vector_store %arg8[%c0_17, %c0_18], %19 {strides = array<i32>} : memref<8x128xf32, #tpu.memory_space<vmem>>, vector<8x128xf32>,
    return
  }
  func.func @transform_0(%arg0: i32) -> (i32, i32) {
    %c0_i32 = arith.constant 0 : i32
    %c0_i32_0 = arith.constant 0 : i32
    return %arg0, %c0_i32 : i32, i32
  }
  func.func @transform_1(%arg0: i32) -> (i32, i32) {
    %c0_i32 = arith.constant 0 : i32
    %c0_i32_0 = arith.constant 0 : i32
    %c0_i32_1 = arith.constant 0 : i32
    return %c0_i32, %c0_i32_0 : i32, i32
  }
  func.func @transform_2(%arg0: i32) -> (i32, i32) {
    %c0_i32 = arith.constant 0 : i32
    %c0_i32_0 = arith.constant 0 : i32
    %c0_i32_1 = arith.constant 0 : i32
    return %c0_i32, %c0_i32_0 : i32, i32
  }
  func.func @transform_3(%arg0: i32) -> (i32, i32) {
    %c0_i32 = arith.constant 0 : i32
    %c0_i32_0 = arith.constant 0 : i32
    %c0_i32_1 = arith.constant 0 : i32
    return %c0_i32, %c0_i32_0 : i32, i32
  }
  func.func @transform_4(%arg0: i32) -> (i32, i32) {
    %c0_i32 = arith.constant 0 : i32
    %c0_i32_0 = arith.constant 0 : i32
    %c0_i32_1 = arith.constant 0 : i32
    return %c0_i32, %c0_i32_0 : i32, i32
  }
  func.func @transform_5(%arg0: i32) -> (i32, i32) {
    %c0_i32 = arith.constant 0 : i32
    %c0_i32_0 = arith.constant 0 : i32
    %c0_i32_1 = arith.constant 0 : i32
    return %c0_i32, %c0_i32_0 : i32, i32
  }
  func.func @transform_6(%arg0: i32) -> (i32, i32) {
    %c0_i32 = arith.constant 0 : i32
    %c0_i32_0 = arith.constant 0 : i32
    %c0_i32_1 = arith.constant 0 : i32
    return %c0_i32, %c0_i32_0 : i32, i32
  }
  func.func @transform_7(%arg0: i32) -> (i32, i32) {
    %c0_i32 = arith.constant 0 : i32
    %c0_i32_0 = arith.constant 0 : i32
    return %arg0, %c0_i32 : i32, i32
  }
}

</mosaic_0001>

<llo_original>
// kernel: tpu_custom_call.1
$region0: #{tpu_custom_call.1}
  #allocation0 [shape = 'u32[]', space=smem, size = 0x4, offset = 0x4, fixed_abs, tag = 'smem constant byte address 0x4 - core index']
  #allocation1 [shape = 'u32[72,128]{1,0:T(1,128)}', space=vmem, size = 0x9000, scoped, tag = 'internal scratch']
  %s0 = inlined_call_operand.hbm [shape: f32[8,32], index: 0, kind: input, shape index: {}]
  %s1 = inlined_call_operand.hbm [shape: f32[32,128], index: 1, kind: input, shape index: {}]
  %s2 = inlined_call_operand.vmem [shape: f32[1,128], index: 2, kind: input, shape index: {}]
  %s3 = inlined_call_operand.hbm [shape: f32[128,256], index: 3, kind: input, shape index: {}]
  %s4 = inlined_call_operand.vmem [shape: f32[1,256], index: 4, kind: input, shape index: {}]
  %s5 = inlined_call_operand.hbm [shape: f32[256,128], index: 5, kind: input, shape index: {}]
  %s6 = inlined_call_operand.vmem [shape: f32[1,128], index: 6, kind: input, shape index: {}]
  %s7 = inlined_call_operand.hbm [shape: f32[8,128], index: 7, kind: output, shape index: {}]
  %s8 = sld [smem:[#allocation0]]
  $region54: #{tpu_custom_call.1} parent=0
    _
  %s10 = ssub.s32 1, %s8
  %s11 = scalar_select 0, %s10, %s8
  $region1: #{tpu_custom_call.1} parent=0
    #allocation2 [shape = 'u8[4096]{0}', space=vmem, size = 0x1000, scoped, tag = 'input window, operand 0, single buffered']
    #allocation3 [shape = 's32[1]{0}', space=sflag, size = 0x4, scoped, tag = 'scoped memory for tpu_custom_call.1']
    #allocation4 [shape = 's32[1]{0}', space=sflag, size = 0x4, scoped, tag = 'scoped memory for tpu_custom_call.1']
    #allocation5 [shape = 'u8[16384]{0}', space=vmem, size = 0x4000, scoped, tag = 'input window, operand 1, single buffered']
    #allocation6 [shape = 's32[1]{0}', space=sflag, size = 0x4, scoped, tag = 'scoped memory for tpu_custom_call.1']
    #allocation7 [shape = 'u8[131072]{0}', space=vmem, size = 0x20000, scoped, tag = 'input window, operand 3, single buffered']
    #allocation8 [shape = 'u8[131072]{0}', space=vmem, size = 0x20000, scoped, tag = 'input window, operand 5, single buffered']
    #allocation9 [shape = 's32[1]{0}', space=sflag, size = 0x4, scoped, tag = 'scoped memory for tpu_custom_call.1']
    #allocation10 [shape = 'u8[4096]{0}', space=vmem, size = 0x1000, scoped, tag = 'output window, operand 0, single buffered']
    %12 = vsyncpa [#allocation3], 0
    %13 = vsyncpa [#allocation6], 0
    %14 = vsyncpa [#allocation9], 0
    %15 = vsyncpa [#allocation4], 0
    // Predicated region
    $region2: #{tpu_custom_call.1} parent=1 // pred_check
      _
    $region3: #{tpu_custom_call.1} parent=1 // pred_check_branch
      %17 = sbr.rel (0) target = $region5
    $region4: #{tpu_custom_call.1} parent=1 // pred_region
      %19 = vsyncadd [#allocation3], 0
      %s21 = sshll.u32 %s0, 4
      %s22 = int_to_ptr.hbm [resolvable:$true] %s21
      %s23 = sshll.u32 [#allocation2], 4
      %s24 = int_to_ptr.vmem [resolvable:$true] %s23
      %26 = dma.hbm_to_vmem [thread:$0]  %s22, 128, %s24, [#allocation3]
    $region5: #{tpu_custom_call.1} parent=1 // pred_fallthru
      _
    // Predicated region
    $region6: #{tpu_custom_call.1} parent=1 // pred_check
      _
    $region7: #{tpu_custom_call.1} parent=1 // pred_check_branch
      %28 = sbr.rel (0) target = $region9
    $region8: #{tpu_custom_call.1} parent=1 // pred_region
      %30 = vsyncadd [#allocation6], 0
      %s31 = sshll.u32 %s1, 4
      %s32 = int_to_ptr.hbm [resolvable:$true] %s31
      %s33 = sshll.u32 [#allocation5], 4
      %s34 = int_to_ptr.vmem [resolvable:$true] %s33
      %39 = dma.hbm_to_vmem [thread:$0]  %s32, 512, %s34, [#allocation6], 128, 128, 8
    $region9: #{tpu_custom_call.1} parent=1 // pred_fallthru
      _
    // Predicated region
    $region10: #{tpu_custom_call.1} parent=1 // pred_check
      _
    $region11: #{tpu_custom_call.1} parent=1 // pred_check_branch
      %41 = sbr.rel (0) target = $region13
    $region12: #{tpu_custom_call.1} parent=1 // pred_region
      _
    $region13: #{tpu_custom_call.1} parent=1 // pred_fallthru
      _
    // Predicated region
    $region14: #{tpu_custom_call.1} parent=1 // pred_check
      _
    $region15: #{tpu_custom_call.1} parent=1 // pred_check_branch
      %43 = sbr.rel (0) target = $region17
    $region16: #{tpu_custom_call.1} parent=1 // pred_region
      %45 = vsyncadd [#allocation6], 0
      %s46 = sshll.u32 %s3, 4
      %s47 = int_to_ptr.hbm [resolvable:$true] %s46
      %s48 = sshll.u32 [#allocation7], 4
      %s49 = int_to_ptr.vmem [resolvable:$true] %s48
      %54 = dma.hbm_to_vmem [thread:$0]  %s47, 4096, %s49, [#allocation6], 256, 256, 16
    $region17: #{tpu_custom_call.1} parent=1 // pred_fallthru
      _
    // Predicated region
    $region18: #{tpu_custom_call.1} parent=1 // pred_check
      _
    $region19: #{tpu_custom_call.1} parent=1 // pred_check_branch
      %56 = sbr.rel (0) target = $region21
    $region20: #{tpu_custom_call.1} parent=1 // pred_region
      _
    $region21: #{tpu_custom_call.1} parent=1 // pred_fallthru
      _
    // Predicated region
    $region22: #{tpu_custom_call.1} parent=1 // pred_check
      _
    $region23: #{tpu_custom_call.1} parent=1 // pred_check_branch
      %58 = sbr.rel (0) target = $region25
    $region24: #{tpu_custom_call.1} parent=1 // pred_region
      %60 = vsyncadd [#allocation9], 0
      %s61 = sshll.u32 %s5, 4
      %s62 = int_to_ptr.hbm [resolvable:$true] %s61
      %s63 = sshll.u32 [#allocation8], 4
      %s64 = int_to_ptr.vmem [resolvable:$true] %s63
      %69 = dma.hbm_to_vmem [thread:$0]  %s62, 4096, %s64, [#allocation9], 128, 128, 8
    $region25: #{tpu_custom_call.1} parent=1 // pred_fallthru
      _
    // Predicated region
    $region26: #{tpu_custom_call.1} parent=1 // pred_check
      _
    $region27: #{tpu_custom_call.1} parent=1 // pred_check_branch
      %71 = sbr.rel (0) target = $region29
    $region28: #{tpu_custom_call.1} parent=1 // pred_region
      _
    $region29: #{tpu_custom_call.1} parent=1 // pred_fallthru
      _
    // Predicated region
    $region30: #{tpu_custom_call.1} parent=1 // pred_check
      _
    $region31: #{tpu_custom_call.1} parent=1 // pred_check_branch
      %73 = sbr.rel (0) target = $region33
    $region32: #{tpu_custom_call.1} parent=1 // pred_region
      %75 = dma.done [#allocation3], 128
    $region33: #{tpu_custom_call.1} parent=1 // pred_fallthru
      _
    // Predicated region
    $region34: #{tpu_custom_call.1} parent=1 // pred_check
      _
    $region35: #{tpu_custom_call.1} parent=1 // pred_check_branch
      %77 = sbr.rel (0) target = $region37
    $region36: #{tpu_custom_call.1} parent=1 // pred_region
      %79 = dma.done [#allocation6], 512
    $region37: #{tpu_custom_call.1} parent=1 // pred_fallthru
      _
    // Predicated region
    $region38: #{tpu_custom_call.1} parent=1 // pred_check
      _
    $region39: #{tpu_custom_call.1} parent=1 // pred_check_branch
      %81 = sbr.rel (0) target = $region41
    $region40: #{tpu_custom_call.1} parent=1 // pred_region
      %83 = dma.done [#allocation6], 4096
    $region41: #{tpu_custom_call.1} parent=1 // pred_fallthru
      _
    // Predicated region
    $region42: #{tpu_custom_call.1} parent=1 // pred_check
      _
    $region43: #{tpu_custom_call.1} parent=1 // pred_check_branch
      %85 = sbr.rel (0) target = $region45
    $region44: #{tpu_custom_call.1} parent=1 // pred_region
      %87 = dma.done [#allocation9], 4096
    $region45: #{tpu_custom_call.1} parent=1 // pred_fallthru
      _
    %v88 = vld [vmem:[#allocation2] sm:$0xff]
    %v89 = vld [vmem:[#allocation5] sm:$0xff]
    %v90 = vld [vmem:[#allocation5 + $0x8] sm:$0xff]
    %v91 = vld [vmem:[#allocation5 + $0x10] sm:$0xff]
    %v92 = vld [vmem:[#allocation5 + $0x18] sm:$0xff]
    %v93 = vld [vmem:[%s2] sm:$0x1]
    %v95 = vperm.slane %v93, 0
    %vm97 = vcmask 261120
    %v99 = vsel %vm97, %v88, 0
    %101 = vmatpush.msra.mxu0 0.0
    %102 = vmatpush.msra.mxu0 0.0
    %103 = vmatpush.msra.mxu0 0.0
    %104 = vmatpush.msra.mxu0 0.0
    %105 = vmatpush.msra.mxu0 0.0
    %106 = vmatpush.msra.mxu0 0.0
    %107 = vmatpush.msra.mxu0 0.0
    %108 = vmatpush.msra.mxu0 0.0
    %109 = vmatpush.msra.mxu0 0.0
    %110 = vmatpush.msra.mxu0 0.0
    %111 = vmatpush.msra.mxu0 0.0
    %112 = vmatpush.msra.mxu0 0.0
    %113 = vmatpush.msra.mxu0 %v92
    %114 = vmatpush.msra.mxu0 %v91
    %115 = vmatpush.msra.mxu0 %v90
    %116 = vmatpush.msra.mxu0 %v89
    %117 = vmatmul.f32.gmra.mxu0 %v99
    %v118 = vpop.f32.mrf.mxu0
    %v119 = vadd.f32 %v95, %v118
    %120 = vdwg.mxu0
    %v121 = vmax.f32 %v119, 0.0
    %v122 = vld [vmem:[#allocation7] sm:$0xff]
    %v123 = vld [vmem:[#allocation7 + $0x8] sm:$0xff]
    %v124 = vld [vmem:[#allocation7 + $0x10] sm:$0xff]
    %v125 = vld [vmem:[#allocation7 + $0x18] sm:$0xff]
    %v126 = vld [vmem:[#allocation7 + $0x20] sm:$0xff]
    %v127 = vld [vmem:[#allocation7 + $0x28] sm:$0xff]
    %v128 = vld [vmem:[#allocation7 + $0x30] sm:$0xff]
    %v129 = vld [vmem:[#allocation7 + $0x38] sm:$0xff]
    %v130 = vld [vmem:[#allocation7 + $0x40] sm:$0xff]
    %v131 = vld [vmem:[#allocation7 + $0x48] sm:$0xff]
    %v132 = vld [vmem:[#allocation7 + $0x50] sm:$0xff]
    %v133 = vld [vmem:[#allocation7 + $0x58] sm:$0xff]
    %v134 = vld [vmem:[#allocation7 + $0x60] sm:$0xff]
    %v135 = vld [vmem:[#allocation7 + $0x68] sm:$0xff]
    %v136 = vld [vmem:[#allocation7 + $0x70] sm:$0xff]
    %v137 = vld [vmem:[#allocation7 + $0x78] sm:$0xff]
    %v138 = vld [vmem:[#allocation7 + $0x80] sm:$0xff]
    %v139 = vld [vmem:[#allocation7 + $0x88] sm:$0xff]
    %v140 = vld [vmem:[#allocation7 + $0x90] sm:$0xff]
    %v141 = vld [vmem:[#allocation7 + $0x98] sm:$0xff]
    %v142 = vld [vmem:[#allocation7 + $0xa0] sm:$0xff]
    %v143 = vld [vmem:[#allocation7 + $0xa8] sm:$0xff]
    %v144 = vld [vmem:[#allocation7 + $0xb0] sm:$0xff]
    %v145 = vld [vmem:[#allocation7 + $0xb8] sm:$0xff]
    %v146 = vld [vmem:[#allocation7 + $0xc0] sm:$0xff]
    %v147 = vld [vmem:[#allocation7 + $0xc8] sm:$0xff]
    %v148 = vld [vmem:[#allocation7 + $0xd0] sm:$0xff]
    %v149 = vld [vmem:[#allocation7 + $0xd8] sm:$0xff]
    %v150 = vld [vmem:[#allocation7 + $0xe0] sm:$0xff]
    %v151 = vld [vmem:[#allocation7 + $0xe8] sm:$0xff]
    %v152 = vld [vmem:[#allocation7 + $0xf0] sm:$0xff]
    %v153 = vld [vmem:[#allocation7 + $0xf8] sm:$0xff]
    %v154 = vld [vmem:[%s4] sm:$0x3]
    %v156 = vperm.slane %v154, 0
    %v157 = vperm.slane %v154, 1
    %160 = vmatpush.msra.mxu0 %v152
    %161 = vmatpush.msra.mxu0 %v150
    %162 = vmatpush.msra.mxu0 %v148
    %163 = vmatpush.msra.mxu0 %v146
    %164 = vmatpush.msra.mxu0 %v144
    %165 = vmatpush.msra.mxu0 %v142
    %166 = vmatpush.msra.mxu0 %v140
    %167 = vmatpush.msra.mxu0 %v138
    %168 = vmatpush.msra.mxu0 %v136
    %169 = vmatpush.msra.mxu0 %v134
    %170 = vmatpush.msra.mxu0 %v132
    %171 = vmatpush.msra.mxu0 %v130
    %172 = vmatpush.msra.mxu0 %v128
    %173 = vmatpush.msra.mxu0 %v126
    %174 = vmatpush.msra.mxu0 %v124
    %175 = vmatpush.msra.mxu0 %v122
    %176 = vmatmul.f32.gmra.mxu0 %v121
    %v177 = vpop.f32.mrf.mxu0
    %v178 = vadd.f32 %v156, %v177
    %179 = vdwg.mxu0
    %180 = vmatpush.msra.mxu0 %v153
    %181 = vmatpush.msra.mxu0 %v151
    %182 = vmatpush.msra.mxu0 %v149
    %183 = vmatpush.msra.mxu0 %v147
    %184 = vmatpush.msra.mxu0 %v145
    %185 = vmatpush.msra.mxu0 %v143
    %186 = vmatpush.msra.mxu0 %v141
    %187 = vmatpush.msra.mxu0 %v139
    %188 = vmatpush.msra.mxu0 %v137
    %189 = vmatpush.msra.mxu0 %v135
    %190 = vmatpush.msra.mxu0 %v133
    %191 = vmatpush.msra.mxu0 %v131
    %192 = vmatpush.msra.mxu0 %v129
    %193 = vmatpush.msra.mxu0 %v127
    %194 = vmatpush.msra.mxu0 %v125
    %195 = vmatpush.msra.mxu0 %v123
    %196 = vmatmul.f32.gmra.mxu0 %v121
    %v197 = vpop.f32.mrf.mxu0
    %v198 = vadd.f32 %v157, %v197
    %199 = vdwg.mxu0
    %v200 = vmax.f32 %v178, 0.0
    %v201 = vmax.f32 %v198, 0.0
    %v202 = vld [vmem:[#allocation8] sm:$0xff]
    %v203 = vld [vmem:[#allocation8 + $0x8] sm:$0xff]
    %v204 = vld [vmem:[#allocation8 + $0x10] sm:$0xff]
    %v205 = vld [vmem:[#allocation8 + $0x18] sm:$0xff]
    %v206 = vld [vmem:[#allocation8 + $0x20] sm:$0xff]
    %v207 = vld [vmem:[#allocation8 + $0x28] sm:$0xff]
    %v208 = vld [vmem:[#allocation8 + $0x30] sm:$0xff]
    %v209 = vld [vmem:[#allocation8 + $0x38] sm:$0xff]
    %v210 = vld [vmem:[#allocation8 + $0x40] sm:$0xff]
    %v211 = vld [vmem:[#allocation8 + $0x48] sm:$0xff]
    %v212 = vld [vmem:[#allocation8 + $0x50] sm:$0xff]
    %v213 = vld [vmem:[#allocation8 + $0x58] sm:$0xff]
    %v214 = vld [vmem:[#allocation8 + $0x60] sm:$0xff]
    %v215 = vld [vmem:[#allocation8 + $0x68] sm:$0xff]
    %v216 = vld [vmem:[#allocation8 + $0x70] sm:$0xff]
    %v217 = vld [vmem:[#allocation8 + $0x78] sm:$0xff]
    %v218 = vld [vmem:[#allocation8 + $0x80] sm:$0xff]
    %v219 = vld [vmem:[#allocation8 + $0x88] sm:$0xff]
    %v220 = vld [vmem:[#allocation8 + $0x90] sm:$0xff]
    %v221 = vld [vmem:[#allocation8 + $0x98] sm:$0xff]
    %v222 = vld [vmem:[#allocation8 + $0xa0] sm:$0xff]
    %v223 = vld [vmem:[#allocation8 + $0xa8] sm:$0xff]
    %v224 = vld [vmem:[#allocation8 + $0xb0] sm:$0xff]
    %v225 = vld [vmem:[#allocation8 + $0xb8] sm:$0xff]
    %v226 = vld [vmem:[#allocation8 + $0xc0] sm:$0xff]
    %v227 = vld [vmem:[#allocation8 + $0xc8] sm:$0xff]
    %v228 = vld [vmem:[#allocation8 + $0xd0] sm:$0xff]
    %v229 = vld [vmem:[#allocation8 + $0xd8] sm:$0xff]
    %v230 = vld [vmem:[#allocation8 + $0xe0] sm:$0xff]
    %v231 = vld [vmem:[#allocation8 + $0xe8] sm:$0xff]
    %v232 = vld [vmem:[#allocation8 + $0xf0] sm:$0xff]
    %v233 = vld [vmem:[#allocation8 + $0xf8] sm:$0xff]
    %v234 = vld [vmem:[%s6] sm:$0x1]
    %v236 = vperm.slane %v234, 0
    %238 = vmatpush.msra.mxu0 %v217
    %239 = vmatpush.msra.mxu0 %v216
    %240 = vmatpush.msra.mxu0 %v215
    %241 = vmatpush.msra.mxu0 %v214
    %242 = vmatpush.msra.mxu0 %v213
    %243 = vmatpush.msra.mxu0 %v212
    %244 = vmatpush.msra.mxu0 %v211
    %245 = vmatpush.msra.mxu0 %v210
    %246 = vmatpush.msra.mxu0 %v209
    %247 = vmatpush.msra.mxu0 %v208
    %248 = vmatpush.msra.mxu0 %v207
    %249 = vmatpush.msra.mxu0 %v206
    %250 = vmatpush.msra.mxu0 %v205
    %251 = vmatpush.msra.mxu0 %v204
    %252 = vmatpush.msra.mxu0 %v203
    %253 = vmatpush.msra.mxu0 %v202
    %254 = vmatmul.f32.gmra.mxu0 %v200
    %v255 = vpop.f32.mrf.mxu0
    %v256 = vadd.f32 %v236, %v255
    %257 = vdwg.mxu0
    %258 = vmatpush.msra.mxu0 %v233
    %259 = vmatpush.msra.mxu0 %v232
    %260 = vmatpush.msra.mxu0 %v231
    %261 = vmatpush.msra.mxu0 %v230
    %262 = vmatpush.msra.mxu0 %v229
    %263 = vmatpush.msra.mxu0 %v228
    %264 = vmatpush.msra.mxu0 %v227
    %265 = vmatpush.msra.mxu0 %v226
    %266 = vmatpush.msra.mxu0 %v225
    %267 = vmatpush.msra.mxu0 %v224
    %268 = vmatpush.msra.mxu0 %v223
    %269 = vmatpush.msra.mxu0 %v222
    %270 = vmatpush.msra.mxu0 %v221
    %271 = vmatpush.msra.mxu0 %v220
    %272 = vmatpush.msra.mxu0 %v219
    %273 = vmatpush.msra.mxu0 %v218
    %274 = vmatmul.f32.gmra.mxu0 %v201
    %v275 = vpop.f32.mrf.mxu0
    %v276 = vadd.f32 %v256, %v275
    %277 = vdwg.mxu0
    %278 = vst [vmem:[#allocation10] sm:$0xff] %v276
    // Predicated region
    $region46: #{tpu_custom_call.1} parent=1 // pred_check
      _
    $region47: #{tpu_custom_call.1} parent=1 // pred_check_branch
      %280 = sbr.rel (0) target = $region49
    $region48: #{tpu_custom_call.1} parent=1 // pred_region
      %282 = vsyncadd [#allocation4], 0
      %s284 = sshll.u32 [#allocation10], 4
      %s285 = int_to_ptr.vmem [resolvable:$true] %s284
      %s286 = sshll.u32 %s7, 4
      %s287 = int_to_ptr.hbm [resolvable:$true] %s286
      %289 = dma.vmem_to_hbm [thread:$0]  %s285, 128, %s287, [#allocation4]
    $region49: #{tpu_custom_call.1} parent=1 // pred_fallthru
      _
    // Predicated region
    $region50: #{tpu_custom_call.1} parent=1 // pred_check
      _
    $region51: #{tpu_custom_call.1} parent=1 // pred_check_branch
      %291 = sbr.rel (0) target = $region53
    $region52: #{tpu_custom_call.1} parent=1 // pred_region
      %293 = dma.done [#allocation4], 128
    $region53: #{tpu_custom_call.1} parent=1 // pred_fallthru
      _
    %294 = vsyncpa [#allocation3], 1
    %295 = vsyncpa [#allocation6], 1
    %296 = vsyncpa [#allocation9], 1
    %297 = vsyncpa [#allocation4], 1

</llo_original>
